<compile_context>
chip_gen: v7x
topology: tpu7x:2x2x1
jax: 0.10.0
libtpu: 0.0.40
codegen_flags: <defaults>
</compile_context>

<pallas_src>
import functools

import jax
import jax.numpy as jnp
from jax import lax
from jax.experimental import pallas as pl
from jax.experimental.pallas import tpu as pltpu


def _round_up(x, m):
    return ((x + m - 1) // m) * m


def _pick_tm(n_rows):
    """Pixel-tile (matmul M) size: large to amortize per-grid-step overhead,
    but leaving >= 2 grid steps when possible so both v7x TensorCores get work."""
    for tm in (1024, 512, 256, 128):
        if n_rows >= 2 * tm:
            return tm
    return 128


_CHUNK = 128  # inner row chunk: bounds the live f32 accumulator to 16 vregs


# ----------------------------- Pallas kernel ------------------------------ #
def _fused_conv_matmul_kernel(p_ref, w_ref, b_ref, o_ref, *, tm):
    # p_ref : (tm, K_pad)        bf16  im2col patches (one row per output pixel)
    # w_ref : (K_pad, Cout_pad)  bf16  fused 3x3(+1x1+id) weights
    # b_ref : (1, Cout_pad)      f32   fused bias
    # o_ref : (tm, Cout_pad)     bf16  output block (lane-dense, 128 lanes)
    w = w_ref[...]
    b = b_ref[...]

    def body(c, carry):
        r0 = pl.multiple_of(c * _CHUNK, _CHUNK)
        x = p_ref[pl.ds(r0, _CHUNK), :]                               # bf16
        acc = jnp.dot(x, w, preferred_element_type=jnp.float32)       # MXU
        out = jnp.clip(acc + b, 0.0, 6.0)                             # bias+relu6
        o_ref[pl.ds(r0, _CHUNK), :] = out.astype(o_ref.dtype)
        return carry

    lax.fori_loop(0, tm // _CHUNK, body, 0, unroll=True)


def _conv_matmul_pallas(patches, w2, b2, *, tm):
    """patches: (P_pad, K_pad) bf16; w2: (K_pad, Cout_pad) bf16; b2: (1, Cout_pad) f32."""
    P_pad, K_pad = patches.shape
    _, cout_pad = w2.shape

    kernel = functools.partial(_fused_conv_matmul_kernel, tm=tm)

    flops = 2 * P_pad * K_pad * cout_pad
    bytes_accessed = (P_pad * K_pad * 2          # patches (bf16)
                      + K_pad * cout_pad * 2     # weights (bf16)
                      + cout_pad * 4             # bias (f32)
                      + P_pad * cout_pad * 2)    # output (bf16)

    return pl.pallas_call(
        kernel,
        out_shape=jax.ShapeDtypeStruct((P_pad, cout_pad), jnp.bfloat16),
        grid=(P_pad // tm,),
        in_specs=[
            pl.BlockSpec((tm, K_pad), lambda i: (i, 0)),
            pl.BlockSpec((K_pad, cout_pad), lambda i: (0, 0)),
            pl.BlockSpec((1, cout_pad), lambda i: (0, 0)),
        ],
        out_specs=pl.BlockSpec((tm, cout_pad), lambda i: (i, 0)),
        compiler_params=pltpu.CompilerParams(
            dimension_semantics=("parallel",),
            vmem_limit_bytes=32 * 1024 * 1024),   # << need; safe on v5e/v6e/v7x
        cost_estimate=pl.CostEstimate(
            flops=flops, transcendentals=0, bytes_accessed=bytes_accessed),
    )(patches, w2, b2)


# ------------------------- parameter setup (glue) -------------------------- #
def init_repvgg_params(key, in_channels, out_channels, num_branches):
    """Deterministic synthetic parameters (PyTorch layout: (Cout, Cin, kh, kw))."""
    params = {"w3": [], "b3": [], "w1": [], "b1": []}
    for _ in range(num_branches):
        key, k1, k2, k3, k4 = jax.random.split(key, 5)
        params["w3"].append(
            jax.random.uniform(k1, (out_channels, in_channels, 3, 3),
                               jnp.float32, -0.3, 0.3))
        params["b3"].append(
            jax.random.uniform(k2, (out_channels,), jnp.float32, -0.1, 0.1))
        params["w1"].append(
            jax.random.uniform(k3, (out_channels, in_channels, 1, 1),
                               jnp.float32, -0.3, 0.3))
        params["b1"].append(
            jax.random.uniform(k4, (out_channels,), jnp.float32, -0.1, 0.1))
    return params


def fuse_params(params, in_channels, out_channels):
    """Fuse all branches into one equivalent 3x3 kernel (HWIO) + bias."""
    w3 = sum(params["w3"])                        # (Cout, Cin, 3, 3)
    w1 = sum(params["w1"])                        # (Cout, Cin, 1, 1)
    w3 = w3.at[:, :, 1, 1].add(w1[:, :, 0, 0])    # 1x1 at the center tap
    if in_channels == out_channels:               # identity shortcut
        w3 = w3.at[:, :, 1, 1].add(jnp.eye(out_channels, dtype=jnp.float32))
    bias = sum(params["b3"]) + sum(params["b1"])
    w_hwio = jnp.transpose(w3, (2, 3, 1, 0))      # (3, 3, Cin, Cout)
    return w_hwio, bias


# ------------------------------- forward ----------------------------------- #
@jax.jit
def repvgg_block_forward(x_nchw, w_hwio, bias):
    N, Cin, H, W = x_nchw.shape
    Cout = w_hwio.shape[-1]
    K = 9 * Cin
    K_pad = _round_up(K, 128)          # lane-dense contraction (review item 6)
    cout_pad = _round_up(Cout, 128)    # lane-dense output stores

    # NCHW -> NHWC + single bf16 cast (fused by XLA into the transpose).
    x = jnp.transpose(x_nchw, (0, 2, 3, 1)).astype(jnp.bfloat16)
    xp = jnp.pad(x, ((0, 0), (1, 1), (1, 1), (0, 0)))        # 'same' halo

    # im2col: 9 shifted views concatenated on the channel axis, in the same
    # (dy, dx, cin) order as the flattened fused weight below.
    taps = [xp[:, dy:dy + H, dx:dx + W, :]
            for dy in range(3) for dx in range(3)]
    P = N * H * W
    patches = jnp.concatenate(taps, axis=-1).reshape(P, K)

    tm = _pick_tm(P)
    P_pad = _round_up(P, tm)                                  # cdiv-style pad
    patches = jnp.pad(patches, ((0, P_pad - P), (0, K_pad - K)))

    w2 = jnp.pad(w_hwio.reshape(K, Cout),
                 ((0, K_pad - K), (0, cout_pad - Cout))).astype(jnp.bfloat16)
    b2 = jnp.pad(bias.reshape(1, Cout),
                 ((0, 0), (0, cout_pad - Cout))).astype(jnp.float32)

    y = _conv_matmul_pallas(patches, w2, b2, tm=tm)           # (P_pad, cout_pad) bf16

    # Drop padded rows/channels, back to f32 NCHW (slice+cast fuse into the
    # transpose in XLA).
    y = y[:P, :Cout].astype(jnp.float32).reshape(N, H, W, Cout)
    return jnp.transpose(y, (0, 3, 1, 2))


# ------------------------------ reference ---------------------------------- #
def _reference_repvgg(x_nchw, params, in_channels, out_channels, num_branches):
    dn = jax.lax.conv_dimension_numbers(x_nchw.shape,
                                        params["w3"][0].shape,
                                        ("NCHW", "OIHW", "NCHW"))

    def conv(x, w):
        return jax.lax.conv_general_dilated(x, w, (1, 1), "SAME",
                                            dimension_numbers=dn)

    h = conv(x_nchw, params["w3"][num_branches - 1]) \
        + params["b3"][num_branches - 1][None, :, None, None]
    for i in range(num_branches - 1):
        h = h + conv(x_nchw, params["w3"][i]) \
            + params["b3"][i][None, :, None, None]
    for i in range(num_branches):
        h = h + conv(x_nchw, params["w1"][i]) \
            + params["b1"][i][None, :, None, None]
    if in_channels == out_channels:
        h = h + x_nchw
    return jnp.clip(h, 0.0, 6.0)


# -------------------------------- main ------------------------------------- #
if __name__ == "__main__":
    N, C_IN, C_OUT, H, W = 2, 4, 4, 16, 16
    NUM_BRANCHES = 2

    key = jax.random.PRNGKey(0)
    key, kx = jax.random.split(key)
    x = jax.random.normal(kx, (N, C_IN, H, W), jnp.float32)

    params = init_repvgg_params(key, C_IN, C_OUT, NUM_BRANCHES)
    w_hwio, bias = fuse_params(params, C_IN, C_OUT)

    out = repvgg_block_forward(x, w_hwio, bias)
    out = jax.block_until_ready(out)

    ref = _reference_repvgg(x, params, C_IN, C_OUT, NUM_BRANCHES)
    assert out.shape == ref.shape == (N, C_OUT, H, W)
    # bf16 matmul inputs/outputs (f32 accumulation) -> loosened tolerance vs
    # the f32 reference.  Intentional inference-precision trade-off.
    max_err = float(jnp.max(jnp.abs(out - ref)))
    assert max_err < 5e-2, f"mismatch vs reference: {max_err}"

    print("KERNEL_OK")
</pallas_src>

<mosaic_0001>
module attributes {stable_mosaic.version = 11 : i64} {
  func.func @_fused_conv_matmul_kernel(%arg0: i32, %arg1: memref<256x128xbf16, #tpu.memory_space<vmem>>, %arg2: memref<128x128xbf16, #tpu.memory_space<vmem>>, %arg3: memref<1x128xf32, #tpu.memory_space<vmem>>, %arg4: memref<256x128xbf16, #tpu.memory_space<vmem>>) attributes {dimension_semantics = [#tpu.dimension_semantics<parallel>], iteration_bounds = array<i64: 2>, scalar_prefetch = 0 : i64, scratch_operands = 0 : i64, tpu.core_type = #tpu.core_type<tc>, window_params = [{transform_indices = @transform_0, window_bounds = array<i64: 256, 128>}, {pipeline_mode = #tpu.pipeline_mode<synchronous>, transform_indices = @transform_1, window_bounds = array<i64: 128, 128>}, {pipeline_mode = #tpu.pipeline_mode<synchronous>, transform_indices = @transform_2, window_bounds = array<i64: 1, 128>}, {transform_indices = @transform_3, window_bounds = array<i64: 256, 128>}]} {
    %c0 = arith.constant 0 : index
    %c0_0 = arith.constant 0 : index
    %0 = vector.load %arg2[%c0, %c0_0] : memref<128x128xbf16, #tpu.memory_space<vmem>>, vector<128x128xbf16>
    %c0_1 = arith.constant 0 : index
    %c0_2 = arith.constant 0 : index
    %1 = vector.load %arg3[%c0_1, %c0_2] : memref<1x128xf32, #tpu.memory_space<vmem>>, vector<1x128xf32>
    %c0_i32 = arith.constant 0 : i32
    %c128_i32 = arith.constant 128 : i32
    %2 = arith.muli %c0_i32, %c128_i32 : i32
    %3 = tpu.assume_multiple %2, 128 : i32
    %4 = arith.index_cast %3 : i32 to index
    %c0_3 = arith.constant 0 : index
    %5 = vector.load %arg1[%4, %c0_3] : memref<256x128xbf16, #tpu.memory_space<vmem>>, vector<128x128xbf16>
    %cst = arith.constant dense<0.000000e+00> : vector<128x128xf32>
    %6 = tpu.matmul %5, %0, %cst {dimension_numbers = #tpu.dot_dimension_numbers<[1], [0], [0], [1], [0, 0, 1, 1], [], []>} : vector<128x128xbf16>, vector<128x128xbf16>, vector<128x128xf32> -> vector<128x128xf32>
    %7 = vector.broadcast %1 : vector<1x128xf32> to vector<128x128xf32>
    %8 = arith.addf %6, %7 : vector<128x128xf32>
    %cst_4 = arith.constant 0.000000e+00 : f32
    %cst_5 = arith.constant 6.000000e+00 : f32
    %9 = vector.broadcast %cst_4 : f32 to vector<128x128xf32>
    %10 = arith.maximumf %9, %8 : vector<128x128xf32>
    %11 = vector.broadcast %cst_5 : f32 to vector<128x128xf32>
    %12 = arith.minimumf %11, %10 : vector<128x128xf32>
    %13 = arith.truncf %12 : vector<128x128xf32> to vector<128x128xbf16>
    %14 = arith.index_cast %3 : i32 to index
    %c0_6 = arith.constant 0 : index
    %15 = vector.load %arg4[%14, %c0_6] : memref<256x128xbf16, #tpu.memory_space<vmem>>, vector<128x128xbf16>
    tpu.vector_store %arg4[%14, %c0_6], %13 {strides = array<i32>} : memref<256x128xbf16, #tpu.memory_space<vmem>>, vector<128x128xbf16>,
    %c1_i32 = arith.constant 1 : i32
    %c128_i32_7 = arith.constant 128 : i32
    %16 = arith.muli %c1_i32, %c128_i32_7 : i32
    %17 = tpu.assume_multiple %16, 128 : i32
    %18 = arith.index_cast %17 : i32 to index
    %c0_8 = arith.constant 0 : index
    %19 = vector.load %arg1[%18, %c0_8] : memref<256x128xbf16, #tpu.memory_space<vmem>>, vector<128x128xbf16>
    %cst_9 = arith.constant dense<0.000000e+00> : vector<128x128xf32>
    %20 = tpu.matmul %19, %0, %cst_9 {dimension_numbers = #tpu.dot_dimension_numbers<[1], [0], [0], [1], [0, 0, 1, 1], [], []>} : vector<128x128xbf16>, vector<128x128xbf16>, vector<128x128xf32> -> vector<128x128xf32>
    %21 = vector.broadcast %1 : vector<1x128xf32> to vector<128x128xf32>
    %22 = arith.addf %20, %21 : vector<128x128xf32>
    %cst_10 = arith.constant 0.000000e+00 : f32
    %cst_11 = arith.constant 6.000000e+00 : f32
    %23 = vector.broadcast %cst_10 : f32 to vector<128x128xf32>
    %24 = arith.maximumf %23, %22 : vector<128x128xf32>
    %25 = vector.broadcast %cst_11 : f32 to vector<128x128xf32>
    %26 = arith.minimumf %25, %24 : vector<128x128xf32>
    %27 = arith.truncf %26 : vector<128x128xf32> to vector<128x128xbf16>
    %28 = arith.index_cast %17 : i32 to index
    %c0_12 = arith.constant 0 : index
    %29 = vector.load %arg4[%28, %c0_12] : memref<256x128xbf16, #tpu.memory_space<vmem>>, vector<128x128xbf16>
    tpu.vector_store %arg4[%28, %c0_12], %27 {strides = array<i32>} : memref<256x128xbf16, #tpu.memory_space<vmem>>, vector<128x128xbf16>,
    %c2_i32 = arith.constant 2 : i32
    return
  }
  func.func @transform_0(%arg0: i32) -> (i32, i32) {
    %c0_i32 = arith.constant 0 : i32
    %c0_i32_0 = arith.constant 0 : i32
    return %arg0, %c0_i32 : i32, i32
  }
  func.func @transform_1(%arg0: i32) -> (i32, i32) {
    %c0_i32 = arith.constant 0 : i32
    %c0_i32_0 = arith.constant 0 : i32
    %c0_i32_1 = arith.constant 0 : i32
    return %c0_i32, %c0_i32_0 : i32, i32
  }
  func.func @transform_2(%arg0: i32) -> (i32, i32) {
    %c0_i32 = arith.constant 0 : i32
    %c0_i32_0 = arith.constant 0 : i32
    %c0_i32_1 = arith.constant 0 : i32
    return %c0_i32, %c0_i32_0 : i32, i32
  }
  func.func @transform_3(%arg0: i32) -> (i32, i32) {
    %c0_i32 = arith.constant 0 : i32
    %c0_i32_0 = arith.constant 0 : i32
    return %arg0, %c0_i32 : i32, i32
  }
}

</mosaic_0001>

<llo_original>
// kernel: repvgg_block_forward.1
$region0: #{repvgg_block_forward.1}
  #allocation0 [shape = 'u32[]', space=smem, size = 0x4, offset = 0x4, fixed_abs, tag = 'smem constant byte address 0x4 - core index']
  #allocation1 [shape = 'u32[144,128]{1,0:T(1,128)}', space=vmem, size = 0x12000, scoped, tag = 'internal scratch']
  %s0 = inlined_call_operand.vmem [shape: bf16[512,128], index: 0, kind: input, shape index: {}]
  %s1 = inlined_call_operand.vmem [shape: bf16[128,128], index: 1, kind: input, shape index: {}]
  %s2 = inlined_call_operand.vmem [shape: f32[1,128], index: 2, kind: input, shape index: {}]
  %s3 = inlined_call_operand.vmem [shape: bf16[512,128], index: 3, kind: output, shape index: {}]
  %s4 = sld [smem:[#allocation0]]
  $region45: #{repvgg_block_forward.1} parent=0
    _
  %s6 = ssub.s32 1, %s4
  %s7 = scalar_select 0, %s6, %s4
  loop: start=0, step=1, limit=4
  $region2: #{repvgg_block_forward.1} parent=0 // loop_pre_header
    _
  $region3: #{repvgg_block_forward.1} parent=0 // loop_header
    %s9 = sphi 0, %s13
    %p10 = scmp.ge.s32.totalorder %s9, 4
    %s19 = sphi 0, %s21
    %s22 = sphi 0, %s19
    %s23 = sphi 0, %s22
    %s39 = sphi 0, %s23
    %s43 = sphi 0, %s43
    %s45 = sphi 0, %s43
    %s46 = sphi 0, %s45
    %s60 = sphi 0, %s46
    %s64 = sphi 0, %s64
    %s66 = sphi 0, %s64
    %s67 = sphi 0, %s66
    %s81 = sphi 0, %s67
    %s87 = sphi 0, %s89
    %s90 = sphi 0, %s87
    %s91 = sphi 0, %s90
    %s107 = sphi 0, %s91
  $region4: #{repvgg_block_forward.1} parent=0 // loop_header_branch
    %12 = sbr.rel (%p10) target = $region8
  $region5: #{repvgg_block_forward.1} parent=0 // loop_body
    %s14 = ssub.s32 %s9, 1
    %s15 = ssub.s32 %s9, 2
    %s16 = sadd.s32 %s9, 1
    %s17 = ssub.s32 %s9, %s16
    %p18 = scmp.eq.s32.totalorder %s17, 0
    %s20 = sadd.s32 %s19, 1
    %s21 = scalar_select %p18, %s19, %s20
    %p24 = pneg %p18
    %p25 = scmp.eq.s32.totalorder %s9, 1
    %p26 = por %p24, %p25
    %p27 = scmp.ne.s32.totalorder %s19, %s22
    %p28 = scmp.eq.s32.totalorder %s9, 0
    %p29 = por %p27, %p28
    %p30 = scmp.ne.s32.totalorder %s19, %s22
    %p31 = scmp.eq.s32.totalorder %s14, 1
    %p32 = por %p30, %p31
    %p33 = scmp.ne.s32.totalorder %s22, %s23
    %p34 = scmp.eq.s32.totalorder %s14, 0
    %p35 = por %p33, %p34
    %p36 = scmp.ne.s32.totalorder %s22, %s23
    %p37 = scmp.eq.s32.totalorder %s15, 1
    %p38 = por %p36, %p37
    %p40 = scmp.ne.s32.totalorder %s23, %s39
    %p41 = scmp.eq.s32.totalorder %s15, 0
    %p42 = por %p40, %p41
    %s44 = sadd.s32 %s43, 1
    %p47 = scmp.eq.s32.totalorder %s9, 1
    %p48 = scmp.ne.s32.totalorder %s43, %s45
    %p49 = scmp.eq.s32.totalorder %s9, 0
    %p50 = por %p48, %p49
    %p51 = scmp.ne.s32.totalorder %s43, %s45
    %p52 = scmp.eq.s32.totalorder %s14, 1
    %p53 = por %p51, %p52
    %p54 = scmp.ne.s32.totalorder %s45, %s46
    %p55 = scmp.eq.s32.totalorder %s14, 0
    %p56 = por %p54, %p55
    %p57 = scmp.ne.s32.totalorder %s45, %s46
    %p58 = scmp.eq.s32.totalorder %s15, 1
    %p59 = por %p57, %p58
    %p61 = scmp.ne.s32.totalorder %s46, %s60
    %p62 = scmp.eq.s32.totalorder %s15, 0
    %p63 = por %p61, %p62
    %s65 = sadd.s32 %s64, 1
    %p68 = scmp.eq.s32.totalorder %s9, 1
    %p69 = scmp.ne.s32.totalorder %s64, %s66
    %p70 = scmp.eq.s32.totalorder %s9, 0
    %p71 = por %p69, %p70
    %p72 = scmp.ne.s32.totalorder %s64, %s66
    %p73 = scmp.eq.s32.totalorder %s14, 1
    %p74 = por %p72, %p73
    %p75 = scmp.ne.s32.totalorder %s66, %s67
    %p76 = scmp.eq.s32.totalorder %s14, 0
    %p77 = por %p75, %p76
    %p78 = scmp.ne.s32.totalorder %s66, %s67
    %p79 = scmp.eq.s32.totalorder %s15, 1
    %p80 = por %p78, %p79
    %p82 = scmp.ne.s32.totalorder %s67, %s81
    %p83 = scmp.eq.s32.totalorder %s15, 0
    %p84 = por %p82, %p83
    %s85 = ssub.s32 %s9, %s16
    %p86 = scmp.eq.s32.totalorder %s85, 0
    %s88 = sadd.s32 %s87, 1
    %s89 = scalar_select %p86, %s87, %s88
    %p92 = pneg %p86
    %p93 = scmp.eq.s32.totalorder %s9, 1
    %p94 = por %p92, %p93
    %p95 = scmp.ne.s32.totalorder %s87, %s90
    %p96 = scmp.eq.s32.totalorder %s9, 0
    %p97 = por %p95, %p96
    %p98 = scmp.ne.s32.totalorder %s87, %s90
    %p99 = scmp.eq.s32.totalorder %s14, 1
    %p100 = por %p98, %p99
    %p101 = scmp.ne.s32.totalorder %s90, %s91
    %p102 = scmp.eq.s32.totalorder %s14, 0
    %p103 = por %p101, %p102
    %p104 = scmp.ne.s32.totalorder %s90, %s91
    %p105 = scmp.eq.s32.totalorder %s15, 1
    %p106 = por %p104, %p105
    %p108 = scmp.ne.s32.totalorder %s91, %s107
    %p109 = scmp.eq.s32.totalorder %s15, 0
    %p110 = por %p108, %p109
    %p111 = scmp.le.s32.totalorder 1, %s9
    %p112 = scmp.lt.s32.totalorder %s9, 3
    %p113 = pnand %p111, %p112
    %p114 = pneg %p113
    // Predicated region
    $region9: #{repvgg_block_forward.1} parent=5 // pred_check
      _
    $region10: #{repvgg_block_forward.1} parent=5 // pred_check_branch
      %116 = sbr.rel (%p113) target = $region12
    $region11: #{repvgg_block_forward.1} parent=5 // pred_region
      %s117 = ssub.s32 %s9, 1
      // Predicated region
      $region13: #{repvgg_block_forward.1} parent=11 // pred_check
        %p118 = pneg %p56
      $region14: #{repvgg_block_forward.1} parent=11 // pred_check_branch
        %120 = sbr.rel (%p118) target = $region16
      $region15: #{repvgg_block_forward.1} parent=11 // pred_region
        _
      $region16: #{repvgg_block_forward.1} parent=11 // pred_fallthru
        _
      // Predicated region
      $region17: #{repvgg_block_forward.1} parent=11 // pred_check
        %p121 = pneg %p77
      $region18: #{repvgg_block_forward.1} parent=11 // pred_check_branch
        %123 = sbr.rel (%p121) target = $region20
      $region19: #{repvgg_block_forward.1} parent=11 // pred_region
        _
      $region20: #{repvgg_block_forward.1} parent=11 // pred_fallthru
        _
    $region12: #{repvgg_block_forward.1} parent=5 // pred_fallthru
      _
    %p124 = scmp.lt.s32.totalorder %s9, 2
    // Predicated region
    $region21: #{repvgg_block_forward.1} parent=5 // pred_check
      %p125 = pneg %p124
    $region22: #{repvgg_block_forward.1} parent=5 // pred_check_branch
      %127 = sbr.rel (%p125) target = $region24
    $region23: #{repvgg_block_forward.1} parent=5 // pred_region
      // Predicated region
      $region25: #{repvgg_block_forward.1} parent=23 // pred_check
        %p128 = pneg %p29
      $region26: #{repvgg_block_forward.1} parent=23 // pred_check_branch
        %130 = sbr.rel (%p128) target = $region28
      $region27: #{repvgg_block_forward.1} parent=23 // pred_region
        %s131 = smul.u32 32, %s9
        %p132 = scmp.lt.s32.totalorder %s131, 63
        %s133 = scalar_select %p132, %s131, 63
        %s134 = smul.addr %s133, 4
        %s135 = scalar_lea.vmem %s0, %s134
        %s136 = smul.u32 32, %s9
      $region28: #{repvgg_block_forward.1} parent=23 // pred_fallthru
        _
    $region24: #{repvgg_block_forward.1} parent=5 // pred_fallthru
      _
    %p137 = scmp.le.s32.totalorder 1, %s9
    %p138 = scmp.lt.s32.totalorder %s9, 3
    %p139 = pnand %p137, %p138
    %p140 = pneg %p139
    // Predicated region
    $region29: #{repvgg_block_forward.1} parent=5 // pred_check
      _
    $region30: #{repvgg_block_forward.1} parent=5 // pred_check_branch
      %142 = sbr.rel (%p139) target = $region32
    $region31: #{repvgg_block_forward.1} parent=5 // pred_region
      %s143 = ssub.s32 %s9, 1
      %s144 = smul.u32 32, %s14
      %p145 = scmp.lt.s32.totalorder %s144, 63
      %s146 = scalar_select %p145, %s144, 63
      %s147 = smul.addr %s146, 4
      %s148 = scalar_lea.vmem %s0, %s147
      %p149 = pneg %p35
      %p150 = pneg %p32
      %p151 = pneg %p56
      %p152 = pneg %p53
      %p153 = pneg %p77
      %p154 = pneg %p74
      %p155 = pneg %p103
      %p156 = pneg %p100
      %s157 = smul.u32 32, %s14
      %p158 = scmp.lt.s32.totalorder %s157, 63
      %s159 = scalar_select %p158, %s157, 63
      %s160 = smul.addr %s159, 4
      %s161 = scalar_lea.vmem %s3, %s160
      %s162 = smul.u32 32, %s14
      %p163 = scmp.lt.s32.totalorder %s162, 63
      %s164 = scalar_select %p163, %s162, 63
      %s165 = smul.addr %s164, 4
      %s166 = scalar_lea.vmem %s0, %s165
      %s167 = smul.u32 32, %s14
      %s168 = smul.u32 32, %s14
      %p169 = scmp.lt.s32.totalorder %s168, 63
      %s170 = scalar_select %p169, %s168, 63
      %s171 = smul.addr %s170, 4
      %s172 = scalar_lea.vmem %s3, %s171
      %s173 = smul.u32 32, %s14
      %v175 = vld [vmem:[%s1] sm:$0xf]
      %v176 = vld [vmem:[%s1 + $0x4] sm:$0xf]
      %v177 = vld [vmem:[%s1 + $0x8] sm:$0xf]
      %v178 = vld [vmem:[%s1 + $0xc] sm:$0xf]
      %v179 = vld [vmem:[%s1 + $0x10] sm:$0xf]
      %v180 = vld [vmem:[%s1 + $0x14] sm:$0xf]
      %v181 = vld [vmem:[%s1 + $0x18] sm:$0xf]
      %v182 = vld [vmem:[%s1 + $0x1c] sm:$0xf]
      %v183 = vld [vmem:[%s1 + $0x20] sm:$0xf]
      %v184 = vld [vmem:[%s1 + $0x24] sm:$0xf]
      %v185 = vld [vmem:[%s1 + $0x28] sm:$0xf]
      %v186 = vld [vmem:[%s1 + $0x2c] sm:$0xf]
      %v187 = vld [vmem:[%s1 + $0x30] sm:$0xf]
      %v188 = vld [vmem:[%s1 + $0x34] sm:$0xf]
      %v189 = vld [vmem:[%s1 + $0x38] sm:$0xf]
      %v190 = vld [vmem:[%s1 + $0x3c] sm:$0xf]
      %v191 = vld [vmem:[%s2] sm:$0x1]
      %v192 = vld [vmem:[%s166] sm:$0xf]
      %v193 = vld [vmem:[%s166 + $0x4] sm:$0xf]
      %v194 = vld [vmem:[%s166 + $0x8] sm:$0xf]
      %v195 = vld [vmem:[%s166 + $0xc] sm:$0xf]
      %v196 = vld [vmem:[%s166 + $0x10] sm:$0xf]
      %v197 = vld [vmem:[%s166 + $0x14] sm:$0xf]
      %v198 = vld [vmem:[%s166 + $0x18] sm:$0xf]
      %v199 = vld [vmem:[%s166 + $0x1c] sm:$0xf]
      %v200 = vld [vmem:[%s166 + $0x20] sm:$0xf]
      %v201 = vld [vmem:[%s166 + $0x24] sm:$0xf]
      %v202 = vld [vmem:[%s166 + $0x28] sm:$0xf]
      %v203 = vld [vmem:[%s166 + $0x2c] sm:$0xf]
      %v204 = vld [vmem:[%s166 + $0x30] sm:$0xf]
      %v205 = vld [vmem:[%s166 + $0x34] sm:$0xf]
      %v206 = vld [vmem:[%s166 + $0x38] sm:$0xf]
      %v207 = vld [vmem:[%s166 + $0x3c] sm:$0xf]
      %v209 = vlaneseq
      %v210 = vshrl.u32 %v209, 7
      %v211 = vsub.s32 0, %v210
      %v212 = vrot.slane %v191, %v211
      %v230 = vunpack.c.l.b16 %v192
      %v231 = vunpack.c.l.b16 %v193
      %v232 = vunpack.c.l.b16 %v194
      %v233 = vunpack.c.l.b16 %v195
      %v234 = vunpack.c.l.b16 %v196
      %v235 = vunpack.c.l.b16 %v197
      %v236 = vunpack.c.l.b16 %v198
      %v237 = vunpack.c.l.b16 %v199
      %v238 = vunpack.c.l.b16 %v200
      %v239 = vunpack.c.l.b16 %v201
      %v240 = vunpack.c.l.b16 %v202
      %v241 = vunpack.c.l.b16 %v203
      %v242 = vunpack.c.l.b16 %v204
      %v243 = vunpack.c.l.b16 %v205
      %v244 = vunpack.c.l.b16 %v206
      %v245 = vunpack.c.l.b16 %v207
      %v246 = vpack.c.b16 %v231, %v230
      %v247 = vpack.c.b16 %v233, %v232
      %v248 = vpack.c.b16 %v235, %v234
      %v249 = vpack.c.b16 %v237, %v236
      %v250 = vpack.c.b16 %v239, %v238
      %v251 = vpack.c.b16 %v241, %v240
      %v252 = vpack.c.b16 %v243, %v242
      %v253 = vpack.c.b16 %v245, %v244
      %v278 = vunpack.c.l.b16 %v175
      %v279 = vunpack.c.l.b16 %v176
      %v280 = vunpack.c.l.b16 %v177
      %v281 = vunpack.c.l.b16 %v178
      %v282 = vunpack.c.l.b16 %v179
      %v283 = vunpack.c.l.b16 %v180
      %v284 = vunpack.c.l.b16 %v181
      %v285 = vunpack.c.l.b16 %v182
      %v286 = vunpack.c.l.b16 %v183
      %v287 = vunpack.c.l.b16 %v184
      %v288 = vunpack.c.l.b16 %v185
      %v289 = vunpack.c.l.b16 %v186
      %v290 = vunpack.c.l.b16 %v187
      %v291 = vunpack.c.l.b16 %v188
      %v292 = vunpack.c.l.b16 %v189
      %v293 = vunpack.c.l.b16 %v190
      %v294 = vpack.c.b16 %v279, %v278
      %v295 = vpack.c.b16 %v281, %v280
      %v296 = vpack.c.b16 %v283, %v282
      %v297 = vpack.c.b16 %v285, %v284
      %v298 = vpack.c.b16 %v287, %v286
      %v299 = vpack.c.b16 %v289, %v288
      %v300 = vpack.c.b16 %v291, %v290
      %v301 = vpack.c.b16 %v293, %v292
      %310 = vmatprep.subr.bf16.mxu0 0
      %311 = vmatpush1.bf16.msra.mxu0 %v294
      %312 = vmatprep.subr.bf16.mxu0 0
      %313 = vmatpush1.bf16.msra.mxu0 %v295
      %314 = vmatprep.subr.bf16.mxu0 0
      %315 = vmatpush1.bf16.msra.mxu0 %v296
      %316 = vmatprep.subr.bf16.mxu0 0
      %317 = vmatpush1.bf16.msra.mxu0 %v297
      %318 = vmatprep.subr.bf16.mxu0 0
      %319 = vmatpush1.bf16.msra.mxu0 %v298
      %320 = vmatprep.subr.bf16.mxu0 0
      %321 = vmatpush1.bf16.msra.mxu0 %v299
      %322 = vmatprep.subr.bf16.mxu0 0
      %323 = vmatpush1.bf16.msra.mxu0 %v300
      %324 = vmatprep.subr.bf16.mxu0 0
      %325 = vmatpush1.bf16.msra.mxu0 %v301
      %326 = vmatprep.subr.bf16.mxu0 0
      %327 = vmatpush1.bf16.msra.mxu0 0
      %328 = vmatprep.subr.bf16.mxu0 0
      %329 = vmatpush1.bf16.msra.mxu0 0
      %330 = vmatprep.subr.bf16.mxu0 0
      %331 = vmatpush1.bf16.msra.mxu0 0
      %332 = vmatprep.subr.bf16.mxu0 0
      %333 = vmatpush1.bf16.msra.mxu0 0
      %334 = vmatprep.subr.bf16.mxu0 0
      %335 = vmatpush1.bf16.msra.mxu0 0
      %336 = vmatprep.subr.bf16.mxu0 0
      %337 = vmatpush1.bf16.msra.mxu0 0
      %338 = vmatprep.subr.bf16.mxu0 0
      %339 = vmatpush1.bf16.msra.mxu0 0
      %340 = vmatprep.subr.bf16.mxu0 0
      %341 = vmatpush1.bf16.msra.mxu0 0
      %342 = vmatprep.mubr.bf16.mxu0 0
      %343 = vmatmul.mubr.bf16.gmra.mrb[0].mxu0 %v246
      %v344 = vpop.f32.mrb[0].mxu0
      %v345 = vadd.f32 %v212, %v344
      %v346 = vpop.f32.mrb[0].mxu0
      %v347 = vpop.f32.mrb[0].mxu0
      %v348 = vadd.f32 %v212, %v347
      %v349 = vpop.f32.mrb[0].mxu0
      %350 = vmatprep.mubr.bf16.mxu0 0
      %351 = vmatmul.mubr.bf16.gmra.mrb[0].mxu0 %v247
      %v352 = vpop.f32.mrb[0].mxu0
      %v353 = vadd.f32 %v212, %v352
      %v354 = vpop.f32.mrb[0].mxu0
      %v355 = vpop.f32.mrb[0].mxu0
      %v356 = vadd.f32 %v212, %v355
      %v357 = vpop.f32.mrb[0].mxu0
      %358 = vmatprep.mubr.bf16.mxu0 0
      %359 = vmatmul.mubr.bf16.gmra.mrb[0].mxu0 %v248
      %v360 = vpop.f32.mrb[0].mxu0
      %v361 = vadd.f32 %v212, %v360
      %v362 = vpop.f32.mrb[0].mxu0
      %v363 = vpop.f32.mrb[0].mxu0
      %v364 = vadd.f32 %v212, %v363
      %v365 = vpop.f32.mrb[0].mxu0
      %366 = vmatprep.mubr.bf16.mxu0 0
      %367 = vmatmul.mubr.bf16.gmra.mrb[0].mxu0 %v249
      %v368 = vpop.f32.mrb[0].mxu0
      %v369 = vadd.f32 %v212, %v368
      %v370 = vpop.f32.mrb[0].mxu0
      %v371 = vpop.f32.mrb[0].mxu0
      %v372 = vadd.f32 %v212, %v371
      %v373 = vpop.f32.mrb[0].mxu0
      %374 = vmatprep.mubr.bf16.mxu0 0
      %375 = vmatmul.mubr.bf16.gmra.mrb[0].mxu0 %v250
      %v376 = vpop.f32.mrb[0].mxu0
      %v377 = vadd.f32 %v212, %v376
      %v378 = vpop.f32.mrb[0].mxu0
      %v379 = vpop.f32.mrb[0].mxu0
      %v380 = vadd.f32 %v212, %v379
      %v381 = vpop.f32.mrb[0].mxu0
      %382 = vmatprep.mubr.bf16.mxu0 0
      %383 = vmatmul.mubr.bf16.gmra.mrb[0].mxu0 %v251
      %v384 = vpop.f32.mrb[0].mxu0
      %v385 = vadd.f32 %v212, %v384
      %v386 = vpop.f32.mrb[0].mxu0
      %v387 = vpop.f32.mrb[0].mxu0
      %v388 = vadd.f32 %v212, %v387
      %v389 = vpop.f32.mrb[0].mxu0
      %390 = vmatprep.mubr.bf16.mxu0 0
      %391 = vmatmul.mubr.bf16.gmra.mrb[0].mxu0 %v252
      %v392 = vpop.f32.mrb[0].mxu0
      %v393 = vadd.f32 %v212, %v392
      %v394 = vpop.f32.mrb[0].mxu0
      %v395 = vpop.f32.mrb[0].mxu0
      %v396 = vadd.f32 %v212, %v395
      %v397 = vpop.f32.mrb[0].mxu0
      %398 = vmatprep.mubr.bf16.mxu0 0
      %399 = vmatmul.mubr.bf16.gmra.mrb[0].mxu0 %v253
      %v400 = vpop.f32.mrb[0].mxu0
      %v401 = vadd.f32 %v212, %v400
      %v402 = vpop.f32.mrb[0].mxu0
      %v403 = vpop.f32.mrb[0].mxu0
      %v404 = vadd.f32 %v212, %v403
      %v405 = vpop.f32.mrb[0].mxu0
      %406 = vdwg.mxu0
      %v407 = vmax.f32 %v345, 0.0
      %v408 = vmax.f32 %v348, 0.0
      %v409 = vmax.f32 %v353, 0.0
      %v410 = vmax.f32 %v356, 0.0
      %v411 = vmax.f32 %v361, 0.0
      %v412 = vmax.f32 %v364, 0.0
      %v413 = vmax.f32 %v369, 0.0
      %v414 = vmax.f32 %v372, 0.0
      %v415 = vmax.f32 %v377, 0.0
      %v416 = vmax.f32 %v380, 0.0
      %v417 = vmax.f32 %v385, 0.0
      %v418 = vmax.f32 %v388, 0.0
      %v419 = vmax.f32 %v393, 0.0
      %v420 = vmax.f32 %v396, 0.0
      %v421 = vmax.f32 %v401, 0.0
      %v422 = vmax.f32 %v404, 0.0
      %v423 = vmin.f32 %v407, 6.0
      %v424 = vmin.f32 %v408, 6.0
      %v425 = vmin.f32 %v409, 6.0
      %v426 = vmin.f32 %v410, 6.0
      %v427 = vmin.f32 %v411, 6.0
      %v428 = vmin.f32 %v412, 6.0
      %v429 = vmin.f32 %v413, 6.0
      %v430 = vmin.f32 %v414, 6.0
      %v431 = vmin.f32 %v415, 6.0
      %v432 = vmin.f32 %v416, 6.0
      %v433 = vmin.f32 %v417, 6.0
      %v434 = vmin.f32 %v418, 6.0
      %v435 = vmin.f32 %v419, 6.0
      %v436 = vmin.f32 %v420, 6.0
      %v437 = vmin.f32 %v421, 6.0
      %v438 = vmin.f32 %v422, 6.0
      %v439 = vpack.c.bf16 %v424, %v423
      %v440 = vpack.c.bf16 %v426, %v425
      %v441 = vpack.c.bf16 %v428, %v427
      %v442 = vpack.c.bf16 %v430, %v429
      %v443 = vpack.c.bf16 %v432, %v431
      %v444 = vpack.c.bf16 %v434, %v433
      %v445 = vpack.c.bf16 %v436, %v435
      %v446 = vpack.c.bf16 %v438, %v437
      %v455 = vunpack.c.l.b16 %v439
      %v456 = vunpack.c.h.b16 %v439
      %v457 = vunpack.c.l.b16 %v440
      %v458 = vunpack.c.h.b16 %v440
      %v459 = vunpack.c.l.b16 %v441
      %v460 = vunpack.c.h.b16 %v441
      %v461 = vunpack.c.l.b16 %v442
      %v462 = vunpack.c.h.b16 %v442
      %v463 = vunpack.c.l.b16 %v443
      %v464 = vunpack.c.h.b16 %v443
      %v465 = vunpack.c.l.b16 %v444
      %v466 = vunpack.c.h.b16 %v444
      %v467 = vunpack.c.l.b16 %v445
      %v468 = vunpack.c.h.b16 %v445
      %v469 = vunpack.c.l.b16 %v446
      %v470 = vunpack.c.h.b16 %v446
      %v471 = vpack.c.b16 %v455, %v455
      %v472 = vpack.c.b16 %v456, %v456
      %v473 = vpack.c.b16 %v457, %v457
      %v474 = vpack.c.b16 %v458, %v458
      %v475 = vpack.c.b16 %v459, %v459
      %v476 = vpack.c.b16 %v460, %v460
      %v477 = vpack.c.b16 %v461, %v461
      %v478 = vpack.c.b16 %v462, %v462
      %v479 = vpack.c.b16 %v463, %v463
      %v480 = vpack.c.b16 %v464, %v464
      %v481 = vpack.c.b16 %v465, %v465
      %v482 = vpack.c.b16 %v466, %v466
      %v483 = vpack.c.b16 %v467, %v467
      %v484 = vpack.c.b16 %v468, %v468
      %v485 = vpack.c.b16 %v469, %v469
      %v486 = vpack.c.b16 %v470, %v470
      %503 = vst [vmem:[%s172] sm:$0xf] %v471
      %504 = vst [vmem:[%s172 + $0x4] sm:$0xf] %v472
      %505 = vst [vmem:[%s172 + $0x8] sm:$0xf] %v473
      %506 = vst [vmem:[%s172 + $0xc] sm:$0xf] %v474
      %507 = vst [vmem:[%s172 + $0x10] sm:$0xf] %v475
      %508 = vst [vmem:[%s172 + $0x14] sm:$0xf] %v476
      %509 = vst [vmem:[%s172 + $0x18] sm:$0xf] %v477
      %510 = vst [vmem:[%s172 + $0x1c] sm:$0xf] %v478
      %511 = vst [vmem:[%s172 + $0x20] sm:$0xf] %v479
      %512 = vst [vmem:[%s172 + $0x24] sm:$0xf] %v480
      %513 = vst [vmem:[%s172 + $0x28] sm:$0xf] %v481
      %514 = vst [vmem:[%s172 + $0x2c] sm:$0xf] %v482
      %515 = vst [vmem:[%s172 + $0x30] sm:$0xf] %v483
      %516 = vst [vmem:[%s172 + $0x34] sm:$0xf] %v484
      %517 = vst [vmem:[%s172 + $0x38] sm:$0xf] %v485
      %518 = vst [vmem:[%s172 + $0x3c] sm:$0xf] %v486
      %s519 = scalar_lea.vmem %s166, 64
      %v520 = vld [vmem:[%s519] sm:$0xf]
      %v521 = vld [vmem:[%s519 + $0x4] sm:$0xf]
      %v522 = vld [vmem:[%s519 + $0x8] sm:$0xf]
      %v523 = vld [vmem:[%s519 + $0xc] sm:$0xf]
      %v524 = vld [vmem:[%s519 + $0x10] sm:$0xf]
      %v525 = vld [vmem:[%s519 + $0x14] sm:$0xf]
      %v526 = vld [vmem:[%s519 + $0x18] sm:$0xf]
      %v527 = vld [vmem:[%s519 + $0x1c] sm:$0xf]
      %v528 = vld [vmem:[%s519 + $0x20] sm:$0xf]
      %v529 = vld [vmem:[%s519 + $0x24] sm:$0xf]
      %v530 = vld [vmem:[%s519 + $0x28] sm:$0xf]
      %v531 = vld [vmem:[%s519 + $0x2c] sm:$0xf]
      %v532 = vld [vmem:[%s519 + $0x30] sm:$0xf]
      %v533 = vld [vmem:[%s519 + $0x34] sm:$0xf]
      %v534 = vld [vmem:[%s519 + $0x38] sm:$0xf]
      %v535 = vld [vmem:[%s519 + $0x3c] sm:$0xf]
      %v552 = vunpack.c.l.b16 %v520
      %v553 = vunpack.c.l.b16 %v521
      %v554 = vunpack.c.l.b16 %v522
      %v555 = vunpack.c.l.b16 %v523
      %v556 = vunpack.c.l.b16 %v524
      %v557 = vunpack.c.l.b16 %v525
      %v558 = vunpack.c.l.b16 %v526
      %v559 = vunpack.c.l.b16 %v527
      %v560 = vunpack.c.l.b16 %v528
      %v561 = vunpack.c.l.b16 %v529
      %v562 = vunpack.c.l.b16 %v530
      %v563 = vunpack.c.l.b16 %v531
      %v564 = vunpack.c.l.b16 %v532
      %v565 = vunpack.c.l.b16 %v533
      %v566 = vunpack.c.l.b16 %v534
      %v567 = vunpack.c.l.b16 %v535
      %v568 = vpack.c.b16 %v553, %v552
      %v569 = vpack.c.b16 %v555, %v554
      %v570 = vpack.c.b16 %v557, %v556
      %v571 = vpack.c.b16 %v559, %v558
      %v572 = vpack.c.b16 %v561, %v560
      %v573 = vpack.c.b16 %v563, %v562
      %v574 = vpack.c.b16 %v565, %v564
      %v575 = vpack.c.b16 %v567, %v566
      %584 = vmatprep.subr.bf16.mxu0 0
      %585 = vmatpush1.bf16.msra.mxu0 %v294
      %586 = vmatprep.subr.bf16.mxu0 0
      %587 = vmatpush1.bf16.msra.mxu0 %v295
      %588 = vmatprep.subr.bf16.mxu0 0
      %589 = vmatpush1.bf16.msra.mxu0 %v296
      %590 = vmatprep.subr.bf16.mxu0 0
      %591 = vmatpush1.bf16.msra.mxu0 %v297
      %592 = vmatprep.subr.bf16.mxu0 0
      %593 = vmatpush1.bf16.msra.mxu0 %v298
      %594 = vmatprep.subr.bf16.mxu0 0
      %595 = vmatpush1.bf16.msra.mxu0 %v299
      %596 = vmatprep.subr.bf16.mxu0 0
      %597 = vmatpush1.bf16.msra.mxu0 %v300
      %598 = vmatprep.subr.bf16.mxu0 0
      %599 = vmatpush1.bf16.msra.mxu0 %v301
      %600 = vmatprep.subr.bf16.mxu0 0
      %601 = vmatpush1.bf16.msra.mxu0 0
      %602 = vmatprep.subr.bf16.mxu0 0
      %603 = vmatpush1.bf16.msra.mxu0 0
      %604 = vmatprep.subr.bf16.mxu0 0
      %605 = vmatpush1.bf16.msra.mxu0 0
      %606 = vmatprep.subr.bf16.mxu0 0
      %607 = vmatpush1.bf16.msra.mxu0 0
      %608 = vmatprep.subr.bf16.mxu0 0
      %609 = vmatpush1.bf16.msra.mxu0 0
      %610 = vmatprep.subr.bf16.mxu0 0
      %611 = vmatpush1.bf16.msra.mxu0 0
      %612 = vmatprep.subr.bf16.mxu0 0
      %613 = vmatpush1.bf16.msra.mxu0 0
      %614 = vmatprep.subr.bf16.mxu0 0
      %615 = vmatpush1.bf16.msra.mxu0 0
      %616 = vmatprep.mubr.bf16.mxu0 0
      %617 = vmatmul.mubr.bf16.gmra.mrb[0].mxu0 %v568
      %v618 = vpop.f32.mrb[0].mxu0
      %v619 = vadd.f32 %v212, %v618
      %v620 = vpop.f32.mrb[0].mxu0
      %v621 = vpop.f32.mrb[0].mxu0
      %v622 = vadd.f32 %v212, %v621
      %v623 = vpop.f32.mrb[0].mxu0
      %624 = vmatprep.mubr.bf16.mxu0 0
      %625 = vmatmul.mubr.bf16.gmra.mrb[0].mxu0 %v569
      %v626 = vpop.f32.mrb[0].mxu0
      %v627 = vadd.f32 %v212, %v626
      %v628 = vpop.f32.mrb[0].mxu0
      %v629 = vpop.f32.mrb[0].mxu0
      %v630 = vadd.f32 %v212, %v629
      %v631 = vpop.f32.mrb[0].mxu0
      %632 = vmatprep.mubr.bf16.mxu0 0
      %633 = vmatmul.mubr.bf16.gmra.mrb[0].mxu0 %v570
      %v634 = vpop.f32.mrb[0].mxu0
      %v635 = vadd.f32 %v212, %v634
      %v636 = vpop.f32.mrb[0].mxu0
      %v637 = vpop.f32.mrb[0].mxu0
      %v638 = vadd.f32 %v212, %v637
      %v639 = vpop.f32.mrb[0].mxu0
      %640 = vmatprep.mubr.bf16.mxu0 0
      %641 = vmatmul.mubr.bf16.gmra.mrb[0].mxu0 %v571
      %v642 = vpop.f32.mrb[0].mxu0
      %v643 = vadd.f32 %v212, %v642
      %v644 = vpop.f32.mrb[0].mxu0
      %v645 = vpop.f32.mrb[0].mxu0
      %v646 = vadd.f32 %v212, %v645
      %v647 = vpop.f32.mrb[0].mxu0
      %648 = vmatprep.mubr.bf16.mxu0 0
      %649 = vmatmul.mubr.bf16.gmra.mrb[0].mxu0 %v572
      %v650 = vpop.f32.mrb[0].mxu0
      %v651 = vadd.f32 %v212, %v650
      %v652 = vpop.f32.mrb[0].mxu0
      %v653 = vpop.f32.mrb[0].mxu0
      %v654 = vadd.f32 %v212, %v653
      %v655 = vpop.f32.mrb[0].mxu0
      %656 = vmatprep.mubr.bf16.mxu0 0
      %657 = vmatmul.mubr.bf16.gmra.mrb[0].mxu0 %v573
      %v658 = vpop.f32.mrb[0].mxu0
      %v659 = vadd.f32 %v212, %v658
      %v660 = vpop.f32.mrb[0].mxu0
      %v661 = vpop.f32.mrb[0].mxu0
      %v662 = vadd.f32 %v212, %v661
      %v663 = vpop.f32.mrb[0].mxu0
      %664 = vmatprep.mubr.bf16.mxu0 0
      %665 = vmatmul.mubr.bf16.gmra.mrb[0].mxu0 %v574
      %v666 = vpop.f32.mrb[0].mxu0
      %v667 = vadd.f32 %v212, %v666
      %v668 = vpop.f32.mrb[0].mxu0
      %v669 = vpop.f32.mrb[0].mxu0
      %v670 = vadd.f32 %v212, %v669
      %v671 = vpop.f32.mrb[0].mxu0
      %672 = vmatprep.mubr.bf16.mxu0 0
      %673 = vmatmul.mubr.bf16.gmra.mrb[0].mxu0 %v575
      %v674 = vpop.f32.mrb[0].mxu0
      %v675 = vadd.f32 %v212, %v674
      %v676 = vpop.f32.mrb[0].mxu0
      %v677 = vpop.f32.mrb[0].mxu0
      %v678 = vadd.f32 %v212, %v677
      %v679 = vpop.f32.mrb[0].mxu0
      %680 = vdwg.mxu0
      %v681 = vmax.f32 %v619, 0.0
      %v682 = vmax.f32 %v622, 0.0
      %v683 = vmax.f32 %v627, 0.0
      %v684 = vmax.f32 %v630, 0.0
      %v685 = vmax.f32 %v635, 0.0
      %v686 = vmax.f32 %v638, 0.0
      %v687 = vmax.f32 %v643, 0.0
      %v688 = vmax.f32 %v646, 0.0
      %v689 = vmax.f32 %v651, 0.0
      %v690 = vmax.f32 %v654, 0.0
      %v691 = vmax.f32 %v659, 0.0
      %v692 = vmax.f32 %v662, 0.0
      %v693 = vmax.f32 %v667, 0.0
      %v694 = vmax.f32 %v670, 0.0
      %v695 = vmax.f32 %v675, 0.0
      %v696 = vmax.f32 %v678, 0.0
      %v697 = vmin.f32 %v681, 6.0
      %v698 = vmin.f32 %v682, 6.0
      %v699 = vmin.f32 %v683, 6.0
      %v700 = vmin.f32 %v684, 6.0
      %v701 = vmin.f32 %v685, 6.0
      %v702 = vmin.f32 %v686, 6.0
      %v703 = vmin.f32 %v687, 6.0
      %v704 = vmin.f32 %v688, 6.0
      %v705 = vmin.f32 %v689, 6.0
      %v706 = vmin.f32 %v690, 6.0
      %v707 = vmin.f32 %v691, 6.0
      %v708 = vmin.f32 %v692, 6.0
      %v709 = vmin.f32 %v693, 6.0
      %v710 = vmin.f32 %v694, 6.0
      %v711 = vmin.f32 %v695, 6.0
      %v712 = vmin.f32 %v696, 6.0
      %v713 = vpack.c.bf16 %v698, %v697
      %v714 = vpack.c.bf16 %v700, %v699
      %v715 = vpack.c.bf16 %v702, %v701
      %v716 = vpack.c.bf16 %v704, %v703
      %v717 = vpack.c.bf16 %v706, %v705
      %v718 = vpack.c.bf16 %v708, %v707
      %v719 = vpack.c.bf16 %v710, %v709
      %v720 = vpack.c.bf16 %v712, %v711
      %v729 = vunpack.c.l.b16 %v713
      %v730 = vunpack.c.h.b16 %v713
      %v731 = vunpack.c.l.b16 %v714
      %v732 = vunpack.c.h.b16 %v714
      %v733 = vunpack.c.l.b16 %v715
      %v734 = vunpack.c.h.b16 %v715
      %v735 = vunpack.c.l.b16 %v716
      %v736 = vunpack.c.h.b16 %v716
      %v737 = vunpack.c.l.b16 %v717
      %v738 = vunpack.c.h.b16 %v717
      %v739 = vunpack.c.l.b16 %v718
      %v740 = vunpack.c.h.b16 %v718
      %v741 = vunpack.c.l.b16 %v719
      %v742 = vunpack.c.h.b16 %v719
      %v743 = vunpack.c.l.b16 %v720
      %v744 = vunpack.c.h.b16 %v720
      %v745 = vpack.c.b16 %v729, %v729
      %v746 = vpack.c.b16 %v730, %v730
      %v747 = vpack.c.b16 %v731, %v731
      %v748 = vpack.c.b16 %v732, %v732
      %v749 = vpack.c.b16 %v733, %v733
      %v750 = vpack.c.b16 %v734, %v734
      %v751 = vpack.c.b16 %v735, %v735
      %v752 = vpack.c.b16 %v736, %v736
      %v753 = vpack.c.b16 %v737, %v737
      %v754 = vpack.c.b16 %v738, %v738
      %v755 = vpack.c.b16 %v739, %v739
      %v756 = vpack.c.b16 %v740, %v740
      %v757 = vpack.c.b16 %v741, %v741
      %v758 = vpack.c.b16 %v742, %v742
      %v759 = vpack.c.b16 %v743, %v743
      %v760 = vpack.c.b16 %v744, %v744
      %s777 = scalar_lea.vmem %s172, 64
      %778 = vst [vmem:[%s777] sm:$0xf] %v745
      %779 = vst [vmem:[%s777 + $0x4] sm:$0xf] %v746
      %780 = vst [vmem:[%s777 + $0x8] sm:$0xf] %v747
      %781 = vst [vmem:[%s777 + $0xc] sm:$0xf] %v748
      %782 = vst [vmem:[%s777 + $0x10] sm:$0xf] %v749
      %783 = vst [vmem:[%s777 + $0x14] sm:$0xf] %v750
      %784 = vst [vmem:[%s777 + $0x18] sm:$0xf] %v751
      %785 = vst [vmem:[%s777 + $0x1c] sm:$0xf] %v752
      %786 = vst [vmem:[%s777 + $0x20] sm:$0xf] %v753
      %787 = vst [vmem:[%s777 + $0x24] sm:$0xf] %v754
      %788 = vst [vmem:[%s777 + $0x28] sm:$0xf] %v755
      %789 = vst [vmem:[%s777 + $0x2c] sm:$0xf] %v756
      %790 = vst [vmem:[%s777 + $0x30] sm:$0xf] %v757
      %791 = vst [vmem:[%s777 + $0x34] sm:$0xf] %v758
      %792 = vst [vmem:[%s777 + $0x38] sm:$0xf] %v759
      %793 = vst [vmem:[%s777 + $0x3c] sm:$0xf] %v760
      %s794 = smul.u32 32, %s14
      %p795 = scmp.lt.s32.totalorder %s794, 63
      %s796 = scalar_select %p795, %s794, 63
      %s797 = smul.addr %s796, 4
      %s798 = scalar_lea.vmem %s3, %s797
      // Predicated region
      $region33: #{repvgg_block_forward.1} parent=31 // pred_check
        %p799 = pneg %p100
      $region34: #{repvgg_block_forward.1} parent=31 // pred_check_branch
        %801 = sbr.rel (%p799) target = $region36
      $region35: #{repvgg_block_forward.1} parent=31 // pred_region
        %s802 = smul.u32 32, %s14
      $region36: #{repvgg_block_forward.1} parent=31 // pred_fallthru
        _
    $region32: #{repvgg_block_forward.1} parent=5 // pred_fallthru
      _
    %p803 = scmp.le.s32.totalorder 2, %s9
    // Predicated region
    $region37: #{repvgg_block_forward.1} parent=5 // pred_check
      %p804 = pneg %p803
    $region38: #{repvgg_block_forward.1} parent=5 // pred_check_branch
      %806 = sbr.rel (%p804) target = $region40
    $region39: #{repvgg_block_forward.1} parent=5 // pred_region
      %s807 = ssub.s32 %s9, 2
      // Predicated region
      $region41: #{repvgg_block_forward.1} parent=39 // pred_check
        %p808 = pneg %p106
      $region42: #{repvgg_block_forward.1} parent=39 // pred_check_branch
        %810 = sbr.rel (%p808) target = $region44
      $region43: #{repvgg_block_forward.1} parent=39 // pred_region
        %s811 = smul.u32 32, %s15
        %p812 = scmp.lt.s32.totalorder %s811, 63
        %s813 = scalar_select %p812, %s811, 63
        %s814 = smul.addr %s813, 4
        %s815 = scalar_lea.vmem %s3, %s814
      $region44: #{repvgg_block_forward.1} parent=39 // pred_fallthru
        _
    $region40: #{repvgg_block_forward.1} parent=5 // pred_fallthru
      _
  $region6: #{repvgg_block_forward.1} parent=0 // loop_footer
    %s13 = sadd.s32 1, %s9
  $region7: #{repvgg_block_forward.1} parent=0 // loop_footer_branch
    %8 = sbr.rel target = $region3
  $region8: #{repvgg_block_forward.1} parent=0 // loop_exit
    _

</llo_original>
